<compile_context>
chip_gen: v5e
topology: v5e:2x2
jax: 0.10.0
libtpu: 0.0.40
codegen_flags: <defaults>
</compile_context>

<pallas_src>
from functools import partial

import jax
import jax.numpy as jnp
from jax.experimental import pallas as pl
from jax.experimental.pallas import tpu as pltpu

LANE = 128       # TPU lane width; every feature dim is zero-padded to this.
SUBLANE = 8

# Row offsets inside the packed parameter slab (all 8-row aligned).
_W1_OFF = 0 * LANE
_W2_OFF = 1 * LANE
_W3_OFF = 2 * LANE
_B1_OFF = 3 * LANE
_B2_OFF = 3 * LANE + SUBLANE
_B3_OFF = 3 * LANE + 2 * SUBLANE
_SLAB_ROWS = 3 * LANE + 3 * SUBLANE           # 408 rows x 128 lanes (~204 KiB f32)


def _round_up(x, m):
    return (x + m - 1) // m * m


def deep_cbow_kernel(ids_ref, emb_ref, params_ref, out_ref):
    """ids: (TB,S) i32 | emb: (V_pad,128) f32 | params: (408,128) f32 | out: (TB,128) f32."""
    TB = out_ref.shape[0]
    S = ids_ref.shape[1]
    V = emb_ref.shape[0]

    # ---- fused embedding gather + sum over sequence -------------------------
    # counts[b, v] = #{ s : ids[b, s] == v }  ->  h = counts @ emb_table (MXU).
    ids = ids_ref[...]                                              # (TB, S) i32
    vocab_iota = jax.lax.broadcasted_iota(jnp.int32, (TB, V), 1)    # (TB, V_pad)
    counts_i = jnp.zeros((TB, V), jnp.int32)
    for s in range(S):                                              # S is tiny & static
        counts_i = counts_i + (ids[:, s:s + 1] == vocab_iota).astype(jnp.int32)
    counts = counts_i.astype(jnp.float32)                           # single convert
    h = jnp.dot(counts, emb_ref[...], preferred_element_type=jnp.float32)   # (TB, 128)

    # ---- 3-layer MLP; operands are static views of the packed slab ----------
    w1 = params_ref[_W1_OFF:_W1_OFF + LANE, :]
    w2 = params_ref[_W2_OFF:_W2_OFF + LANE, :]
    w3 = params_ref[_W3_OFF:_W3_OFF + LANE, :]
    b1 = params_ref[_B1_OFF:_B1_OFF + 1, :]
    b2 = params_ref[_B2_OFF:_B2_OFF + 1, :]
    b3 = params_ref[_B3_OFF:_B3_OFF + 1, :]

    h = jnp.maximum(jnp.dot(h, w1, preferred_element_type=jnp.float32) + b1, 0.0)
    h = jnp.maximum(jnp.dot(h, w2, preferred_element_type=jnp.float32) + b2, 0.0)
    out_ref[...] = jnp.dot(h, w3, preferred_element_type=jnp.float32) + b3


# ------------------------- host-side one-time packing -------------------------

def pad_emb_table(emb_table):
    """(V, E) -> (round_up(V,128), 128), zero padded."""
    V, E = emb_table.shape
    assert E <= LANE, "embedding_dim must be <= 128 for this packing"
    V_pad = _round_up(V, LANE)
    return jnp.zeros((V_pad, LANE), jnp.float32).at[:V, :E].set(emb_table)


def pack_params(w1, b1, w2, b2, w3, b3):
    """Pack the 3 (in,out) weights + 3 biases into one (408, 128) f32 slab."""
    for w in (w1, w2, w3):
        assert w.shape[0] <= LANE and w.shape[1] <= LANE
    for b in (b1, b2, b3):
        assert b.size <= LANE
    slab = jnp.zeros((_SLAB_ROWS, LANE), jnp.float32)

    def put_w(s, off, w):
        return s.at[off:off + w.shape[0], :w.shape[1]].set(w)

    def put_b(s, off, b):
        b = b.reshape(1, -1)
        return s.at[off:off + 1, :b.shape[1]].set(b)

    slab = put_w(slab, _W1_OFF, w1)
    slab = put_w(slab, _W2_OFF, w2)
    slab = put_w(slab, _W3_OFF, w3)
    slab = put_b(slab, _B1_OFF, b1)
    slab = put_b(slab, _B2_OFF, b2)
    slab = put_b(slab, _B3_OFF, b3)
    return slab


# --------------------------------- forward -----------------------------------

@partial(jax.jit, static_argnames=("output_dim", "batch_tile"))
def deep_cbow_forward(inputs, emb_padded, params_slab, output_dim, batch_tile=None):
    """inputs: (B, S) int32 token ids.  Returns logits (B, output_dim) f32."""
    assert output_dim <= LANE
    B, S = inputs.shape
    V_pad = emb_padded.shape[0]

    # Batch tile: whole (8-row padded) batch if small, else 256-row MXU tiles.
    B_pad8 = _round_up(B, SUBLANE)
    TB = batch_tile if batch_tile is not None else min(256, B_pad8)
    TB = _round_up(TB, SUBLANE)
    B_pad = _round_up(B, TB)
    n_tiles = B_pad // TB

    ids = inputs.astype(jnp.int32)
    if B_pad != B:
        ids = jnp.pad(ids, ((0, B_pad - B), (0, 0)))   # padded rows use token 0

    flops = 2 * B_pad * (V_pad + 3 * LANE) * LANE
    bytes_accessed = 4 * (ids.size + emb_padded.size + params_slab.size + B_pad * LANE)

    out = pl.pallas_call(
        deep_cbow_kernel,
        out_shape=jax.ShapeDtypeStruct((B_pad, LANE), jnp.float32),
        grid=(n_tiles,),
        in_specs=[
            # ids pipeline through VMEM per batch tile...
            pl.BlockSpec((TB, S), lambda i: (i, 0)),
            # ...while the emb table and packed param slab stay VMEM-resident
            # (constant block index => DMA'd once per call, not per step).
            pl.BlockSpec((V_pad, LANE), lambda i: (0, 0)),
            pl.BlockSpec((_SLAB_ROWS, LANE), lambda i: (0, 0)),
        ],
        out_specs=pl.BlockSpec((TB, LANE), lambda i: (i, 0)),
        compiler_params=pltpu.CompilerParams(
            dimension_semantics=("parallel",),       # v7x: shard tiles over 2 TCs
        ),
        cost_estimate=pl.CostEstimate(
            flops=flops, transcendentals=0, bytes_accessed=bytes_accessed),
    )(ids, emb_padded, params_slab)

    # Slice the lane-dense, batch-padded kernel output down to the real logits.
    return out[:B, :output_dim]


# ------------------------------ reference / init ------------------------------

def init_params(key, vocab_size, embedding_dim, hidden_dim, output_dim):
    ks = jax.random.split(key, 7)

    def uniform(k, shape, bound):
        return jax.random.uniform(k, shape, jnp.float32, -bound, bound)

    emb_table = jax.random.normal(ks[0], (vocab_size, embedding_dim), jnp.float32)

    bnd1 = 1.0 / (embedding_dim ** 0.5)
    w1 = uniform(ks[1], (embedding_dim, hidden_dim), bnd1)
    b1 = uniform(ks[2], (1, hidden_dim), bnd1)

    bnd2 = 1.0 / (hidden_dim ** 0.5)
    w2 = uniform(ks[3], (hidden_dim, hidden_dim), bnd2)
    b2 = uniform(ks[4], (1, hidden_dim), bnd2)

    w3 = uniform(ks[5], (hidden_dim, output_dim), bnd2)
    b3 = uniform(ks[6], (1, output_dim), bnd2)

    return emb_table, w1, b1, w2, b2, w3, b3


def reference_forward(inputs, emb_table, w1, b1, w2, b2, w3, b3):
    embeds = jnp.take(emb_table, inputs, axis=0)
    h = jnp.sum(embeds, axis=1)
    h = jax.nn.relu(h @ w1 + b1)
    h = jax.nn.relu(h @ w2 + b2)
    return h @ w3 + b3


if __name__ == "__main__":
    vocab_size, embedding_dim, hidden_dim, output_dim = 50, 32, 32, 5
    seq = 6

    key = jax.random.PRNGKey(0)
    k_params, k_ids1, k_ids2 = jax.random.split(key, 3)
    emb_table, w1, b1, w2, b2, w3, b3 = init_params(
        k_params, vocab_size, embedding_dim, hidden_dim, output_dim)

    # One-time host-side packing (reused across forward calls).
    emb_padded = pad_emb_table(emb_table)
    params_slab = pack_params(w1, b1, w2, b2, w3, b3)

    # Case 1: small batch, single tile (grid = (1,)).
    ids_small = jax.random.randint(k_ids1, (8, seq), 0, vocab_size, dtype=jnp.int32)
    out_small = jax.block_until_ready(
        deep_cbow_forward(ids_small, emb_padded, params_slab, output_dim))
    ref_small = reference_forward(ids_small, emb_table, w1, b1, w2, b2, w3, b3)
    assert out_small.shape == (8, output_dim)
    assert jnp.allclose(out_small, ref_small, atol=1e-4, rtol=1e-4), \
        f"max abs err {jnp.max(jnp.abs(out_small - ref_small))}"

    # Case 2: larger (padded) batch with multiple batch tiles -> exercises the
    # batch grid + resident weights path (grid = (3,) with TB=16, B_pad=48).
    ids_big = jax.random.randint(k_ids2, (40, seq), 0, vocab_size, dtype=jnp.int32)
    out_big = jax.block_until_ready(
        deep_cbow_forward(ids_big, emb_padded, params_slab, output_dim, batch_tile=16))
    ref_big = reference_forward(ids_big, emb_table, w1, b1, w2, b2, w3, b3)
    assert out_big.shape == (40, output_dim)
    assert jnp.allclose(out_big, ref_big, atol=1e-4, rtol=1e-4), \
        f"max abs err {jnp.max(jnp.abs(out_big - ref_big))}"

    print("KERNEL_OK")
</pallas_src>

<mosaic_0001>
module attributes {stable_mosaic.version = 11 : i64} {
  func.func @deep_cbow_kernel(%arg0: i32, %arg1: memref<8x6xi32, #tpu.memory_space<vmem>>, %arg2: memref<128x128xf32, #tpu.memory_space<vmem>>, %arg3: memref<408x128xf32, #tpu.memory_space<vmem>>, %arg4: memref<8x128xf32, #tpu.memory_space<vmem>>) attributes {dimension_semantics = [#tpu.dimension_semantics<parallel>], iteration_bounds = array<i64: 1>, scalar_prefetch = 0 : i64, scratch_operands = 0 : i64, tpu.core_type = #tpu.core_type<tc>, window_params = [{transform_indices = @transform_0, window_bounds = array<i64: 8, 6>}, {pipeline_mode = #tpu.pipeline_mode<synchronous>, transform_indices = @transform_1, window_bounds = array<i64: 128, 128>}, {pipeline_mode = #tpu.pipeline_mode<synchronous>, transform_indices = @transform_2, window_bounds = array<i64: 408, 128>}, {transform_indices = @transform_3, window_bounds = array<i64: 8, 128>}]} {
    %c0 = arith.constant 0 : index
    %c0_0 = arith.constant 0 : index
    %0 = vector.load %arg1[%c0, %c0_0] : memref<8x6xi32, #tpu.memory_space<vmem>>, vector<8x6xi32>
    %1 = tpu.iota {dimensions = array<i32: 1>} : vector<8x128xi32>
    %c0_i32 = arith.constant 0 : i32
    %2 = vector.broadcast %c0_i32 : i32 to vector<8x128xi32>
    %3 = vector.extract_strided_slice %0 {offsets = [0, 0], sizes = [8, 1], strides = [1, 1]} : vector<8x6xi32> to vector<8x1xi32>
    %4 = vector.broadcast %3 : vector<8x1xi32> to vector<8x128xi32>
    %5 = arith.cmpi eq, %4, %1 : vector<8x128xi32>
    %6 = arith.extui %5 : vector<8x128xi1> to vector<8x128xi32>
    %7 = arith.addi %2, %6 : vector<8x128xi32>
    %8 = vector.extract_strided_slice %0 {offsets = [0, 1], sizes = [8, 1], strides = [1, 1]} : vector<8x6xi32> to vector<8x1xi32>
    %9 = vector.broadcast %8 : vector<8x1xi32> to vector<8x128xi32>
    %10 = arith.cmpi eq, %9, %1 : vector<8x128xi32>
    %11 = arith.extui %10 : vector<8x128xi1> to vector<8x128xi32>
    %12 = arith.addi %7, %11 : vector<8x128xi32>
    %13 = vector.extract_strided_slice %0 {offsets = [0, 2], sizes = [8, 1], strides = [1, 1]} : vector<8x6xi32> to vector<8x1xi32>
    %14 = vector.broadcast %13 : vector<8x1xi32> to vector<8x128xi32>
    %15 = arith.cmpi eq, %14, %1 : vector<8x128xi32>
    %16 = arith.extui %15 : vector<8x128xi1> to vector<8x128xi32>
    %17 = arith.addi %12, %16 : vector<8x128xi32>
    %18 = vector.extract_strided_slice %0 {offsets = [0, 3], sizes = [8, 1], strides = [1, 1]} : vector<8x6xi32> to vector<8x1xi32>
    %19 = vector.broadcast %18 : vector<8x1xi32> to vector<8x128xi32>
    %20 = arith.cmpi eq, %19, %1 : vector<8x128xi32>
    %21 = arith.extui %20 : vector<8x128xi1> to vector<8x128xi32>
    %22 = arith.addi %17, %21 : vector<8x128xi32>
    %23 = vector.extract_strided_slice %0 {offsets = [0, 4], sizes = [8, 1], strides = [1, 1]} : vector<8x6xi32> to vector<8x1xi32>
    %24 = vector.broadcast %23 : vector<8x1xi32> to vector<8x128xi32>
    %25 = arith.cmpi eq, %24, %1 : vector<8x128xi32>
    %26 = arith.extui %25 : vector<8x128xi1> to vector<8x128xi32>
    %27 = arith.addi %22, %26 : vector<8x128xi32>
    %28 = vector.extract_strided_slice %0 {offsets = [0, 5], sizes = [8, 1], strides = [1, 1]} : vector<8x6xi32> to vector<8x1xi32>
    %29 = vector.broadcast %28 : vector<8x1xi32> to vector<8x128xi32>
    %30 = arith.cmpi eq, %29, %1 : vector<8x128xi32>
    %31 = arith.extui %30 : vector<8x128xi1> to vector<8x128xi32>
    %32 = arith.addi %27, %31 : vector<8x128xi32>
    %33 = arith.sitofp %32 : vector<8x128xi32> to vector<8x128xf32>
    %c0_1 = arith.constant 0 : index
    %c0_2 = arith.constant 0 : index
    %34 = vector.load %arg2[%c0_1, %c0_2] : memref<128x128xf32, #tpu.memory_space<vmem>>, vector<128x128xf32>
    %cst = arith.constant dense<0.000000e+00> : vector<8x128xf32>
    %35 = tpu.matmul %33, %34, %cst {dimension_numbers = #tpu.dot_dimension_numbers<[1], [0], [0], [1], [0, 0, 1, 1], [], []>} : vector<8x128xf32>, vector<128x128xf32>, vector<8x128xf32> -> vector<8x128xf32>
    %c0_3 = arith.constant 0 : index
    %c0_4 = arith.constant 0 : index
    %36 = vector.load %arg3[%c0_3, %c0_4] : memref<408x128xf32, #tpu.memory_space<vmem>>, vector<128x128xf32>
    %c128 = arith.constant 128 : index
    %c0_5 = arith.constant 0 : index
    %37 = vector.load %arg3[%c128, %c0_5] : memref<408x128xf32, #tpu.memory_space<vmem>>, vector<128x128xf32>
    %c256 = arith.constant 256 : index
    %c0_6 = arith.constant 0 : index
    %38 = vector.load %arg3[%c256, %c0_6] : memref<408x128xf32, #tpu.memory_space<vmem>>, vector<128x128xf32>
    %c384 = arith.constant 384 : index
    %c0_7 = arith.constant 0 : index
    %39 = vector.load %arg3[%c384, %c0_7] : memref<408x128xf32, #tpu.memory_space<vmem>>, vector<1x128xf32>
    %c392 = arith.constant 392 : index
    %c0_8 = arith.constant 0 : index
    %40 = vector.load %arg3[%c392, %c0_8] : memref<408x128xf32, #tpu.memory_space<vmem>>, vector<1x128xf32>
    %c400 = arith.constant 400 : index
    %c0_9 = arith.constant 0 : index
    %41 = vector.load %arg3[%c400, %c0_9] : memref<408x128xf32, #tpu.memory_space<vmem>>, vector<1x128xf32>
    %cst_10 = arith.constant dense<0.000000e+00> : vector<8x128xf32>
    %42 = tpu.matmul %35, %36, %cst_10 {dimension_numbers = #tpu.dot_dimension_numbers<[1], [0], [0], [1], [0, 0, 1, 1], [], []>} : vector<8x128xf32>, vector<128x128xf32>, vector<8x128xf32> -> vector<8x128xf32>
    %43 = vector.broadcast %39 : vector<1x128xf32> to vector<8x128xf32>
    %44 = arith.addf %42, %43 : vector<8x128xf32>
    %cst_11 = arith.constant 0.000000e+00 : f32
    %45 = vector.broadcast %cst_11 : f32 to vector<8x128xf32>
    %46 = arith.maximumf %44, %45 : vector<8x128xf32>
    %cst_12 = arith.constant dense<0.000000e+00> : vector<8x128xf32>
    %47 = tpu.matmul %46, %37, %cst_12 {dimension_numbers = #tpu.dot_dimension_numbers<[1], [0], [0], [1], [0, 0, 1, 1], [], []>} : vector<8x128xf32>, vector<128x128xf32>, vector<8x128xf32> -> vector<8x128xf32>
    %48 = vector.broadcast %40 : vector<1x128xf32> to vector<8x128xf32>
    %49 = arith.addf %47, %48 : vector<8x128xf32>
    %cst_13 = arith.constant 0.000000e+00 : f32
    %50 = vector.broadcast %cst_13 : f32 to vector<8x128xf32>
    %51 = arith.maximumf %49, %50 : vector<8x128xf32>
    %cst_14 = arith.constant dense<0.000000e+00> : vector<8x128xf32>
    %52 = tpu.matmul %51, %38, %cst_14 {dimension_numbers = #tpu.dot_dimension_numbers<[1], [0], [0], [1], [0, 0, 1, 1], [], []>} : vector<8x128xf32>, vector<128x128xf32>, vector<8x128xf32> -> vector<8x128xf32>
    %53 = vector.broadcast %41 : vector<1x128xf32> to vector<8x128xf32>
    %54 = arith.addf %52, %53 : vector<8x128xf32>
    %c0_15 = arith.constant 0 : index
    %c0_16 = arith.constant 0 : index
    %55 = vector.load %arg4[%c0_15, %c0_16] : memref<8x128xf32, #tpu.memory_space<vmem>>, vector<8x128xf32>
    tpu.vector_store %arg4[%c0_15, %c0_16], %54 {strides = array<i32>} : memref<8x128xf32, #tpu.memory_space<vmem>>, vector<8x128xf32>,
    return
  }
  func.func @transform_0(%arg0: i32) -> (i32, i32) {
    %c0_i32 = arith.constant 0 : i32
    %c0_i32_0 = arith.constant 0 : i32
    return %arg0, %c0_i32 : i32, i32
  }
  func.func @transform_1(%arg0: i32) -> (i32, i32) {
    %c0_i32 = arith.constant 0 : i32
    %c0_i32_0 = arith.constant 0 : i32
    %c0_i32_1 = arith.constant 0 : i32
    return %c0_i32, %c0_i32_0 : i32, i32
  }
  func.func @transform_2(%arg0: i32) -> (i32, i32) {
    %c0_i32 = arith.constant 0 : i32
    %c0_i32_0 = arith.constant 0 : i32
    %c0_i32_1 = arith.constant 0 : i32
    return %c0_i32, %c0_i32_0 : i32, i32
  }
  func.func @transform_3(%arg0: i32) -> (i32, i32) {
    %c0_i32 = arith.constant 0 : i32
    %c0_i32_0 = arith.constant 0 : i32
    return %arg0, %c0_i32 : i32, i32
  }
}

</mosaic_0001>

<llo_original>
// kernel: deep_cbow_forward.1
$region0: #{deep_cbow_forward.1}
  #allocation0 [shape = 'u32[]', space=smem, size = 0x4, offset = 0x4, fixed_abs, tag = 'smem constant byte address 0x4 - core index']
  #allocation1 [shape = 'u32[72,128]{1,0:T(1,128)}', space=vmem, size = 0x9000, scoped, tag = 'internal scratch']
  %s0 = inlined_call_operand.hbm [shape: s32[8,6], index: 0, kind: input, shape index: {}]
  %s1 = inlined_call_operand.hbm [shape: f32[128,128], index: 1, kind: input, shape index: {}]
  %s2 = inlined_call_operand.hbm [shape: f32[408,128], index: 2, kind: input, shape index: {}]
  %s3 = inlined_call_operand.hbm [shape: f32[8,128], index: 3, kind: output, shape index: {}]
  %s4 = sld [smem:[#allocation0]]
  $region34: #{deep_cbow_forward.1} parent=0
    _
  %s6 = ssub.s32 1, %s4
  %s7 = scalar_select 0, %s6, %s4
  $region1: #{deep_cbow_forward.1} parent=0
    #allocation2 [shape = 'u8[4096]{0}', space=vmem, size = 0x1000, scoped, tag = 'input window, operand 0, single buffered']
    #allocation3 [shape = 's32[1]{0}', space=sflag, size = 0x4, scoped, tag = 'scoped memory for deep_cbow_forward.1']
    #allocation4 [shape = 's32[1]{0}', space=sflag, size = 0x4, scoped, tag = 'scoped memory for deep_cbow_forward.1']
    #allocation5 [shape = 'u8[65536]{0}', space=vmem, size = 0x10000, scoped, tag = 'input window, operand 1, single buffered']
    #allocation6 [shape = 's32[1]{0}', space=sflag, size = 0x4, scoped, tag = 'scoped memory for deep_cbow_forward.1']
    #allocation7 [shape = 'u8[208896]{0}', space=vmem, size = 0x33000, scoped, tag = 'input window, operand 2, single buffered']
    #allocation8 [shape = 'u8[4096]{0}', space=vmem, size = 0x1000, scoped, tag = 'output window, operand 0, single buffered']
    %8 = vsyncpa [#allocation3], 0
    %9 = vsyncpa [#allocation6], 0
    %10 = vsyncpa [#allocation4], 0
    // Predicated region
    $region2: #{deep_cbow_forward.1} parent=1 // pred_check
      _
    $region3: #{deep_cbow_forward.1} parent=1 // pred_check_branch
      %12 = sbr.rel (0) target = $region5
    $region4: #{deep_cbow_forward.1} parent=1 // pred_region
      %14 = vsyncadd [#allocation3], 0
      %s16 = sshll.u32 %s0, 4
      %s17 = int_to_ptr.hbm [resolvable:$true] %s16
      %s18 = sshll.u32 [#allocation2], 4
      %s19 = int_to_ptr.vmem [resolvable:$true] %s18
      %21 = dma.hbm_to_vmem [thread:$0]  %s17, 128, %s19, [#allocation3]
    $region5: #{deep_cbow_forward.1} parent=1 // pred_fallthru
      _
    // Predicated region
    $region6: #{deep_cbow_forward.1} parent=1 // pred_check
      _
    $region7: #{deep_cbow_forward.1} parent=1 // pred_check_branch
      %23 = sbr.rel (0) target = $region9
    $region8: #{deep_cbow_forward.1} parent=1 // pred_region
      %25 = vsyncadd [#allocation6], 0
      %s26 = sshll.u32 %s1, 4
      %s27 = int_to_ptr.hbm [resolvable:$true] %s26
      %s28 = sshll.u32 [#allocation5], 4
      %s29 = int_to_ptr.vmem [resolvable:$true] %s28
      %34 = dma.hbm_to_vmem [thread:$0]  %s27, 2048, %s29, [#allocation6], 128, 128, 8
    $region9: #{deep_cbow_forward.1} parent=1 // pred_fallthru
      _
    // Predicated region
    $region10: #{deep_cbow_forward.1} parent=1 // pred_check
      _
    $region11: #{deep_cbow_forward.1} parent=1 // pred_check_branch
      %36 = sbr.rel (0) target = $region13
    $region12: #{deep_cbow_forward.1} parent=1 // pred_region
      %38 = vsyncadd [#allocation6], 0
      %s39 = sshll.u32 %s2, 4
      %s40 = int_to_ptr.hbm [resolvable:$true] %s39
      %s41 = sshll.u32 [#allocation7], 4
      %s42 = int_to_ptr.vmem [resolvable:$true] %s41
      %47 = dma.hbm_to_vmem [thread:$0]  %s40, 6528, %s42, [#allocation6], 128, 128, 8
    $region13: #{deep_cbow_forward.1} parent=1 // pred_fallthru
      _
    // Predicated region
    $region14: #{deep_cbow_forward.1} parent=1 // pred_check
      _
    $region15: #{deep_cbow_forward.1} parent=1 // pred_check_branch
      %49 = sbr.rel (0) target = $region17
    $region16: #{deep_cbow_forward.1} parent=1 // pred_region
      %51 = dma.done [#allocation3], 128
    $region17: #{deep_cbow_forward.1} parent=1 // pred_fallthru
      _
    // Predicated region
    $region18: #{deep_cbow_forward.1} parent=1 // pred_check
      _
    $region19: #{deep_cbow_forward.1} parent=1 // pred_check_branch
      %53 = sbr.rel (0) target = $region21
    $region20: #{deep_cbow_forward.1} parent=1 // pred_region
      %55 = dma.done [#allocation6], 2048
    $region21: #{deep_cbow_forward.1} parent=1 // pred_fallthru
      _
    // Predicated region
    $region22: #{deep_cbow_forward.1} parent=1 // pred_check
      _
    $region23: #{deep_cbow_forward.1} parent=1 // pred_check_branch
      %57 = sbr.rel (0) target = $region25
    $region24: #{deep_cbow_forward.1} parent=1 // pred_region
      %59 = dma.done [#allocation6], 6528
    $region25: #{deep_cbow_forward.1} parent=1 // pred_fallthru
      _
    %v60 = vld [vmem:[#allocation2] sm:$0xff]
    %v61 = vlaneseq
    %v62 = vand.u32 %v61, 127
    %63 = vset.pattern.permute.xlu0 0
    %64 = vperm.xlu0 %63, %v60
    %v65 = vpop.permute.xlu0 %64
    %vm66 = vcmp.eq.s32.totalorder %v65, %v62
    %v67 = vsel %vm66, 1, 0
    %68 = vset.pattern.permute.xlu0 1
    %69 = vperm.xlu0 %68, %v60
    %v70 = vpop.permute.xlu0 %69
    %vm71 = vcmp.eq.s32.totalorder %v70, %v62
    %v72 = vsel %vm71, 1, 0
    %v73 = vadd.s32 %v67, %v72
    %74 = vset.pattern.permute.xlu0 2
    %75 = vperm.xlu0 %74, %v60
    %v76 = vpop.permute.xlu0 %75
    %vm77 = vcmp.eq.s32.totalorder %v76, %v62
    %v78 = vsel %vm77, 1, 0
    %v79 = vadd.s32 %v73, %v78
    %80 = vset.pattern.permute.xlu0 3
    %81 = vperm.xlu0 %80, %v60
    %v82 = vpop.permute.xlu0 %81
    %vm83 = vcmp.eq.s32.totalorder %v82, %v62
    %v84 = vsel %vm83, 1, 0
    %v85 = vadd.s32 %v79, %v84
    %86 = vset.pattern.permute.xlu0 4
    %87 = vperm.xlu0 %86, %v60
    %v88 = vpop.permute.xlu0 %87
    %vm89 = vcmp.eq.s32.totalorder %v88, %v62
    %v90 = vsel %vm89, 1, 0
    %v91 = vadd.s32 %v85, %v90
    %92 = vset.pattern.permute.xlu0 5
    %93 = vperm.xlu0 %92, %v60
    %v94 = vpop.permute.xlu0 %93
    %vm95 = vcmp.eq.s32.totalorder %v94, %v62
    %v96 = vsel %vm95, 1, 0
    %v97 = vadd.s32 %v91, %v96
    %v98 = vcvt.s32.f32 %v97
    %v99 = vld [vmem:[#allocation5] sm:$0xff]
    %v100 = vld [vmem:[#allocation5 + $0x8] sm:$0xff]
    %v101 = vld [vmem:[#allocation5 + $0x10] sm:$0xff]
    %v102 = vld [vmem:[#allocation5 + $0x18] sm:$0xff]
    %v103 = vld [vmem:[#allocation5 + $0x20] sm:$0xff]
    %v104 = vld [vmem:[#allocation5 + $0x28] sm:$0xff]
    %v105 = vld [vmem:[#allocation5 + $0x30] sm:$0xff]
    %v106 = vld [vmem:[#allocation5 + $0x38] sm:$0xff]
    %v107 = vld [vmem:[#allocation5 + $0x40] sm:$0xff]
    %v108 = vld [vmem:[#allocation5 + $0x48] sm:$0xff]
    %v109 = vld [vmem:[#allocation5 + $0x50] sm:$0xff]
    %v110 = vld [vmem:[#allocation5 + $0x58] sm:$0xff]
    %v111 = vld [vmem:[#allocation5 + $0x60] sm:$0xff]
    %v112 = vld [vmem:[#allocation5 + $0x68] sm:$0xff]
    %v113 = vld [vmem:[#allocation5 + $0x70] sm:$0xff]
    %v114 = vld [vmem:[#allocation5 + $0x78] sm:$0xff]
    %115 = vmatpush.msra.mxu0 %v114
    %116 = vmatpush.msra.mxu0 %v113
    %117 = vmatpush.msra.mxu0 %v112
    %118 = vmatpush.msra.mxu0 %v111
    %119 = vmatpush.msra.mxu0 %v110
    %120 = vmatpush.msra.mxu0 %v109
    %121 = vmatpush.msra.mxu0 %v108
    %122 = vmatpush.msra.mxu0 %v107
    %123 = vmatpush.msra.mxu0 %v106
    %124 = vmatpush.msra.mxu0 %v105
    %125 = vmatpush.msra.mxu0 %v104
    %126 = vmatpush.msra.mxu0 %v103
    %127 = vmatpush.msra.mxu0 %v102
    %128 = vmatpush.msra.mxu0 %v101
    %129 = vmatpush.msra.mxu0 %v100
    %130 = vmatpush.msra.mxu0 %v99
    %131 = vmatmul.f32.gmra.mxu0 %v98
    %v132 = vpop.f32.mrf.mxu0
    %v133 = vadd.f32 0.0, %v132
    %134 = vdwg.mxu0
    %v135 = vld [vmem:[#allocation7] sm:$0xff]
    %v136 = vld [vmem:[#allocation7 + $0x8] sm:$0xff]
    %v137 = vld [vmem:[#allocation7 + $0x10] sm:$0xff]
    %v138 = vld [vmem:[#allocation7 + $0x18] sm:$0xff]
    %v139 = vld [vmem:[#allocation7 + $0x20] sm:$0xff]
    %v140 = vld [vmem:[#allocation7 + $0x28] sm:$0xff]
    %v141 = vld [vmem:[#allocation7 + $0x30] sm:$0xff]
    %v142 = vld [vmem:[#allocation7 + $0x38] sm:$0xff]
    %v143 = vld [vmem:[#allocation7 + $0x40] sm:$0xff]
    %v144 = vld [vmem:[#allocation7 + $0x48] sm:$0xff]
    %v145 = vld [vmem:[#allocation7 + $0x50] sm:$0xff]
    %v146 = vld [vmem:[#allocation7 + $0x58] sm:$0xff]
    %v147 = vld [vmem:[#allocation7 + $0x60] sm:$0xff]
    %v148 = vld [vmem:[#allocation7 + $0x68] sm:$0xff]
    %v149 = vld [vmem:[#allocation7 + $0x70] sm:$0xff]
    %v150 = vld [vmem:[#allocation7 + $0x78] sm:$0xff]
    %v151 = vld [vmem:[#allocation7 + $0x80] sm:$0xff]
    %v152 = vld [vmem:[#allocation7 + $0x88] sm:$0xff]
    %v153 = vld [vmem:[#allocation7 + $0x90] sm:$0xff]
    %v154 = vld [vmem:[#allocation7 + $0x98] sm:$0xff]
    %v155 = vld [vmem:[#allocation7 + $0xa0] sm:$0xff]
    %v156 = vld [vmem:[#allocation7 + $0xa8] sm:$0xff]
    %v157 = vld [vmem:[#allocation7 + $0xb0] sm:$0xff]
    %v158 = vld [vmem:[#allocation7 + $0xb8] sm:$0xff]
    %v159 = vld [vmem:[#allocation7 + $0xc0] sm:$0xff]
    %v160 = vld [vmem:[#allocation7 + $0xc8] sm:$0xff]
    %v161 = vld [vmem:[#allocation7 + $0xd0] sm:$0xff]
    %v162 = vld [vmem:[#allocation7 + $0xd8] sm:$0xff]
    %v163 = vld [vmem:[#allocation7 + $0xe0] sm:$0xff]
    %v164 = vld [vmem:[#allocation7 + $0xe8] sm:$0xff]
    %v165 = vld [vmem:[#allocation7 + $0xf0] sm:$0xff]
    %v166 = vld [vmem:[#allocation7 + $0xf8] sm:$0xff]
    %v167 = vld [vmem:[#allocation7 + $0x100] sm:$0xff]
    %v168 = vld [vmem:[#allocation7 + $0x108] sm:$0xff]
    %v169 = vld [vmem:[#allocation7 + $0x110] sm:$0xff]
    %v170 = vld [vmem:[#allocation7 + $0x118] sm:$0xff]
    %v171 = vld [vmem:[#allocation7 + $0x120] sm:$0xff]
    %v172 = vld [vmem:[#allocation7 + $0x128] sm:$0xff]
    %v173 = vld [vmem:[#allocation7 + $0x130] sm:$0xff]
    %v174 = vld [vmem:[#allocation7 + $0x138] sm:$0xff]
    %v175 = vld [vmem:[#allocation7 + $0x140] sm:$0xff]
    %v176 = vld [vmem:[#allocation7 + $0x148] sm:$0xff]
    %v177 = vld [vmem:[#allocation7 + $0x150] sm:$0xff]
    %v178 = vld [vmem:[#allocation7 + $0x158] sm:$0xff]
    %v179 = vld [vmem:[#allocation7 + $0x160] sm:$0xff]
    %v180 = vld [vmem:[#allocation7 + $0x168] sm:$0xff]
    %v181 = vld [vmem:[#allocation7 + $0x170] sm:$0xff]
    %v182 = vld [vmem:[#allocation7 + $0x178] sm:$0xff]
    %v183 = vld [vmem:[#allocation7 + $0x180] sm:$0x1]
    %v184 = vld [vmem:[#allocation7 + $0x188] sm:$0x1]
    %v185 = vld [vmem:[#allocation7 + $0x190] sm:$0x1]
    %v186 = vperm.slane %v183, 0
    %187 = vmatpush.msra.mxu0 %v150
    %188 = vmatpush.msra.mxu0 %v149
    %189 = vmatpush.msra.mxu0 %v148
    %190 = vmatpush.msra.mxu0 %v147
    %191 = vmatpush.msra.mxu0 %v146
    %192 = vmatpush.msra.mxu0 %v145
    %193 = vmatpush.msra.mxu0 %v144
    %194 = vmatpush.msra.mxu0 %v143
    %195 = vmatpush.msra.mxu0 %v142
    %196 = vmatpush.msra.mxu0 %v141
    %197 = vmatpush.msra.mxu0 %v140
    %198 = vmatpush.msra.mxu0 %v139
    %199 = vmatpush.msra.mxu0 %v138
    %200 = vmatpush.msra.mxu0 %v137
    %201 = vmatpush.msra.mxu0 %v136
    %202 = vmatpush.msra.mxu0 %v135
    %203 = vmatmul.f32.gmra.mxu0 %v133
    %v204 = vpop.f32.mrf.mxu0
    %v205 = vadd.f32 %v186, %v204
    %206 = vdwg.mxu0
    %v207 = vmax.f32 %v205, 0.0
    %v208 = vperm.slane %v184, 0
    %209 = vmatpush.msra.mxu0 %v166
    %210 = vmatpush.msra.mxu0 %v165
    %211 = vmatpush.msra.mxu0 %v164
    %212 = vmatpush.msra.mxu0 %v163
    %213 = vmatpush.msra.mxu0 %v162
    %214 = vmatpush.msra.mxu0 %v161
    %215 = vmatpush.msra.mxu0 %v160
    %216 = vmatpush.msra.mxu0 %v159
    %217 = vmatpush.msra.mxu0 %v158
    %218 = vmatpush.msra.mxu0 %v157
    %219 = vmatpush.msra.mxu0 %v156
    %220 = vmatpush.msra.mxu0 %v155
    %221 = vmatpush.msra.mxu0 %v154
    %222 = vmatpush.msra.mxu0 %v153
    %223 = vmatpush.msra.mxu0 %v152
    %224 = vmatpush.msra.mxu0 %v151
    %225 = vmatmul.f32.gmra.mxu0 %v207
    %v226 = vpop.f32.mrf.mxu0
    %v227 = vadd.f32 %v208, %v226
    %228 = vdwg.mxu0
    %v229 = vmax.f32 %v227, 0.0
    %v230 = vperm.slane %v185, 0
    %231 = vmatpush.msra.mxu0 %v182
    %232 = vmatpush.msra.mxu0 %v181
    %233 = vmatpush.msra.mxu0 %v180
    %234 = vmatpush.msra.mxu0 %v179
    %235 = vmatpush.msra.mxu0 %v178
    %236 = vmatpush.msra.mxu0 %v177
    %237 = vmatpush.msra.mxu0 %v176
    %238 = vmatpush.msra.mxu0 %v175
    %239 = vmatpush.msra.mxu0 %v174
    %240 = vmatpush.msra.mxu0 %v173
    %241 = vmatpush.msra.mxu0 %v172
    %242 = vmatpush.msra.mxu0 %v171
    %243 = vmatpush.msra.mxu0 %v170
    %244 = vmatpush.msra.mxu0 %v169
    %245 = vmatpush.msra.mxu0 %v168
    %246 = vmatpush.msra.mxu0 %v167
    %247 = vmatmul.f32.gmra.mxu0 %v229
    %v248 = vpop.f32.mrf.mxu0
    %v249 = vadd.f32 %v230, %v248
    %250 = vdwg.mxu0
    %251 = vst [vmem:[#allocation8] sm:$0xff] %v249
    // Predicated region
    $region26: #{deep_cbow_forward.1} parent=1 // pred_check
      _
    $region27: #{deep_cbow_forward.1} parent=1 // pred_check_branch
      %253 = sbr.rel (0) target = $region29
    $region28: #{deep_cbow_forward.1} parent=1 // pred_region
      %255 = vsyncadd [#allocation4], 0
      %s257 = sshll.u32 [#allocation8], 4
      %s258 = int_to_ptr.vmem [resolvable:$true] %s257
      %s259 = sshll.u32 %s3, 4
      %s260 = int_to_ptr.hbm [resolvable:$true] %s259
      %262 = dma.vmem_to_hbm [thread:$0]  %s258, 128, %s260, [#allocation4]
    $region29: #{deep_cbow_forward.1} parent=1 // pred_fallthru
      _
    // Predicated region
    $region30: #{deep_cbow_forward.1} parent=1 // pred_check
      _
    $region31: #{deep_cbow_forward.1} parent=1 // pred_check_branch
      %264 = sbr.rel (0) target = $region33
    $region32: #{deep_cbow_forward.1} parent=1 // pred_region
      %266 = dma.done [#allocation4], 128
    $region33: #{deep_cbow_forward.1} parent=1 // pred_fallthru
      _
    %267 = vsyncpa [#allocation3], 1
    %268 = vsyncpa [#allocation6], 1
    %269 = vsyncpa [#allocation4], 1

</llo_original>
